<compile_context>
chip_gen: v5e
topology: v5e:2x2
jax: 0.10.0
libtpu: 0.0.40
codegen_flags: <defaults>
</compile_context>

<pallas_src>
import jax
import jax.numpy as jnp
from jax.experimental import pallas as pl
from jax.experimental.pallas import tpu as pltpu


def mlp_kernel(x_ref, w1_ref, b1_ref, w2_ref, b2_ref, o_ref, acc_ref):
    k = pl.program_id(1)

    @pl.when(k == 0)
    def _init():
        acc_ref[...] = jnp.zeros_like(acc_ref)

    # fc1 partial product for this K slab; MXU inputs in W1's dtype, f32 acc.
    x_tile = x_ref[...].astype(w1_ref.dtype)
    acc_ref[...] += jnp.dot(x_tile, w1_ref[...],
                            preferred_element_type=jnp.float32)

    @pl.when(k == pl.num_programs(1) - 1)
    def _finalize():
        # Bias + ReLU on the f32 accumulator, then fc2 with f32 accumulation.
        h = jnp.maximum(acc_ref[...] + b1_ref[...], 0.0)
        out = jnp.dot(h.astype(w2_ref.dtype), w2_ref[...],
                      preferred_element_type=jnp.float32)
        o_ref[...] = (out + b2_ref[...]).astype(o_ref.dtype)


def _round_up(x, m):
    return ((x + m - 1) // m) * m


def _pad_to(a, shape):
    pads = [(0, t - s) for s, t in zip(a.shape, shape)]
    return jnp.pad(a, pads)


def _vmem_limit_bytes():
    try:
        cap = int(pltpu.get_tpu_info().vmem_capacity_bytes)
    except Exception:
        cap = 64 * 1024 * 1024  # conservative default (v7x physical VMEM)
    # ~3/4 of physical VMEM: ~48 MiB on v7x (64 MiB), ~96 MiB on v5e/v6e (128 MiB).
    return min((cap * 3) // 4, 100 * 1024 * 1024)


def _pick_tm(batch, block_b):
    """Largest sublane-aligned batch tile <= block_b that minimizes padding,
    preferring >=2 grid steps (v7x 2-TC sharding) when the batch allows."""
    bp8 = _round_up(batch, 8)
    cap = min(_round_up(block_b, 8), bp8)
    if bp8 >= 16 and cap >= bp8:
        cap = max(8, _round_up(bp8 // 2, 8))
    best_tm, best_pad = 8, None
    for tm in range(8, cap + 1, 8):
        pad = pl.cdiv(batch, tm) * tm - batch
        if best_pad is None or pad < best_pad or (pad == best_pad and tm > best_tm):
            best_tm, best_pad = tm, pad
    return best_tm


def _pick_tk(Dp, Hp, Cp, tm, mxu_bytes, vmem_limit):
    """Largest 128-multiple K slab that divides Dp while keeping the estimated
    VMEM footprint (resident W2/biases, f32 accumulator, double-buffered
    x / W1 / out tiles) under ~half the scoped VMEM limit."""
    resident = (Hp * Cp * mxu_bytes      # W2 (single-buffered, MXU dtype)
                + (Hp + Cp) * 4          # biases (f32)
                + tm * Hp * 4            # f32 fc1 accumulator scratch
                + tm * Hp * mxu_bytes    # h cast to MXU dtype for fc2
                + 2 * tm * Cp * 4)       # double-buffered output tile
    budget = vmem_limit // 2 - resident
    per_tk_col = 2 * (tm + Hp) * mxu_bytes   # double-buffered x + W1 slabs
    cap_tk = 128
    if budget > 0:
        cap_tk = max(128, (budget // per_tk_col) // 128 * 128)
    n = Dp // 128
    best = 1
    for d in range(1, n + 1):
        if n % d == 0 and d * 128 <= cap_tk:
            best = d
    return best * 128


def prepare_params(w1, b1, w2, b2, *, use_bf16=True):
    """One-time pad to MXU-aligned shapes + cast to the MXU dtype.

    Hoisted out of the per-call path so every forward reuses the same
    pre-formatted, lane-aligned weight arrays (no per-call HBM pad/cast pass).
    w1: [D, H]; b1: [H]; w2: [H, C]; b2: [C].
    """
    D, H = w1.shape
    C = w2.shape[1]
    Dp, Hp, Cp = (_round_up(d, 128) for d in (D, H, C))
    mxu_dtype = jnp.bfloat16 if use_bf16 else jnp.float32
    return dict(
        w1=_pad_to(w1, (Dp, Hp)).astype(mxu_dtype),
        b1=_pad_to(b1.reshape(1, -1), (1, Hp)).astype(jnp.float32),
        w2=_pad_to(w2, (Hp, Cp)).astype(mxu_dtype),
        b2=_pad_to(b2.reshape(1, -1), (1, Cp)).astype(jnp.float32),
        dims=(D, H, C),
    )


def mlp_forward(x, params, *, block_b=256, out_dtype=jnp.float32):
    """x: [B, D]. params: from prepare_params(). Returns [B, C] in out_dtype."""
    w1p, b1p, w2p, b2p = params["w1"], params["b1"], params["w2"], params["b2"]
    D, H, C = params["dims"]
    Dp, Hp = w1p.shape
    Cp = w2p.shape[1]
    B = x.shape[0]
    assert x.shape[1] == D, f"expected input dim {D}, got {x.shape[1]}"

    mxu_dtype = w1p.dtype
    vmem_limit = _vmem_limit_bytes()

    tm = _pick_tm(B, block_b)
    Bp = pl.cdiv(B, tm) * tm
    tk = _pick_tk(Dp, Hp, Cp, tm, mxu_dtype.itemsize, vmem_limit)
    num_b = Bp // tm
    num_k = Dp // tk

    # Skip the wrapper pad/cast HBM pass when x is already tile-aligned; the
    # kernel casts the activation tile to the MXU dtype itself.
    if B == Bp and D == Dp:
        xp = x
    else:
        xp = _pad_to(x, (Bp, Dp)).astype(mxu_dtype)

    def _call(single_buffer_resident):
        resident = pl.Buffered(1) if single_buffer_resident else None
        w1_mode = resident if num_k == 1 else None  # streamed W1 keeps 2 buffers
        return pl.pallas_call(
            mlp_kernel,
            out_shape=jax.ShapeDtypeStruct((Bp, Cp), out_dtype),
            grid=(num_b, num_k),
            in_specs=[
                # Activations: one (batch, K) tile per grid step.
                pl.BlockSpec((tm, tk), lambda i, k: (i, k)),
                # W1: streamed along K; resident (single-buffered) if num_k == 1.
                pl.BlockSpec((tk, Hp), lambda i, k: (k, 0), pipeline_mode=w1_mode),
                # Biases / W2: constant index_map -> fetched once, VMEM-resident.
                pl.BlockSpec((1, Hp), lambda i, k: (0, 0), pipeline_mode=resident),
                pl.BlockSpec((Hp, Cp), lambda i, k: (0, 0), pipeline_mode=resident),
                pl.BlockSpec((1, Cp), lambda i, k: (0, 0), pipeline_mode=resident),
            ],
            # Lane-dense output slab; block index constant across K (accumulator).
            out_specs=pl.BlockSpec((tm, Cp), lambda i, k: (i, 0)),
            scratch_shapes=[pltpu.VMEM((tm, Hp), jnp.float32)],
            compiler_params=pltpu.CompilerParams(
                dimension_semantics=("parallel", "arbitrary"),
                vmem_limit_bytes=vmem_limit,
            ),
        )(xp, w1p, b1p, w2p, b2p)

    try:
        out_padded = _call(True)
    except Exception:
        # pl.Buffered(1) unsupported in this JAX build; fall back to defaults.
        out_padded = _call(False)

    # Strip batch / class padding (layout plumbing, not compute).
    return out_padded[:B, :C]


def init_params(key, input_size, hidden_size, num_classes):
    # Deterministic init mimicking nn.Linear's uniform(-1/sqrt(fan_in), +).
    k1, k2, k3, k4 = jax.random.split(key, 4)
    lim1 = 1.0 / jnp.sqrt(input_size)
    lim2 = 1.0 / jnp.sqrt(hidden_size)
    w1 = jax.random.uniform(k1, (input_size, hidden_size), jnp.float32, -lim1, lim1)
    b1 = jax.random.uniform(k2, (hidden_size,), jnp.float32, -lim1, lim1)
    w2 = jax.random.uniform(k3, (hidden_size, num_classes), jnp.float32, -lim2, lim2)
    b2 = jax.random.uniform(k4, (num_classes,), jnp.float32, -lim2, lim2)
    return w1, b1, w2, b2


if __name__ == "__main__":
    key = jax.random.PRNGKey(0)
    batch = 8
    input_size = 4
    hidden_size = 16
    num_classes = 3

    kx, kp = jax.random.split(key)
    x = jax.random.normal(kx, (batch, input_size), jnp.float32)
    w1, b1, w2, b2 = init_params(kp, input_size, hidden_size, num_classes)

    params = prepare_params(w1, b1, w2, b2)   # one-time pad + bf16 cast
    out = mlp_forward(x, params)
    out = jax.block_until_ready(out)
    assert out.shape == (batch, num_classes)

    # Reference with matching bf16 MXU inputs + f32 accumulation.
    xb, w1b, w2b = (a.astype(jnp.bfloat16) for a in (x, w1, w2))
    h_ref = jnp.maximum(
        jnp.dot(xb, w1b, preferred_element_type=jnp.float32) + b1, 0.0)
    ref_bf16 = jnp.dot(h_ref.astype(jnp.bfloat16), w2b,
                       preferred_element_type=jnp.float32) + b2
    assert jnp.allclose(out, ref_bf16, atol=1e-4, rtol=1e-4), "mismatch vs bf16 reference"

    # Loose check against the full-f32 reference (bf16 cast error budget).
    ref_f32 = jnp.maximum(x @ w1 + b1, 0.0) @ w2 + b2
    assert jnp.allclose(out, ref_f32, atol=5e-2, rtol=5e-2), "mismatch vs f32 reference"

    print("KERNEL_OK")
</pallas_src>

<mosaic_0001>
module attributes {stable_mosaic.version = 11 : i64} {
  func.func @mlp_kernel(%arg0: i32, %arg1: i32, %arg2: memref<8x128xbf16, #tpu.memory_space<vmem>>, %arg3: memref<128x128xbf16, #tpu.memory_space<vmem>>, %arg4: memref<1x128xf32, #tpu.memory_space<vmem>>, %arg5: memref<128x128xbf16, #tpu.memory_space<vmem>>, %arg6: memref<1x128xf32, #tpu.memory_space<vmem>>, %arg7: memref<8x128xf32, #tpu.memory_space<vmem>>, %arg8: memref<8x128xf32, #tpu.memory_space<vmem>>) attributes {dimension_semantics = [#tpu.dimension_semantics<parallel>, #tpu.dimension_semantics<arbitrary>], iteration_bounds = array<i64: 1, 1>, scalar_prefetch = 0 : i64, scratch_operands = 1 : i64, tpu.core_type = #tpu.core_type<tc>, window_params = [{transform_indices = @transform_0, window_bounds = array<i64: 8, 128>}, {pipeline_mode = #tpu.pipeline_mode<synchronous>, transform_indices = @transform_1, window_bounds = array<i64: 128, 128>}, {pipeline_mode = #tpu.pipeline_mode<synchronous>, transform_indices = @transform_2, window_bounds = array<i64: 1, 128>}, {pipeline_mode = #tpu.pipeline_mode<synchronous>, transform_indices = @transform_3, window_bounds = array<i64: 128, 128>}, {pipeline_mode = #tpu.pipeline_mode<synchronous>, transform_indices = @transform_4, window_bounds = array<i64: 1, 128>}, {transform_indices = @transform_5, window_bounds = array<i64: 8, 128>}]} {
    %c0_i32 = arith.constant 0 : i32
    %0 = arith.cmpi eq, %arg1, %c0_i32 : i32
    %1 = arith.extui %0 : i1 to i32
    %c0_i32_0 = arith.constant 0 : i32
    %2 = arith.cmpi ne, %1, %c0_i32_0 : i32
    scf.if %2 {
      %cst_10 = arith.constant 0.000000e+00 : f32
      %12 = vector.broadcast %cst_10 : f32 to vector<8x128xf32>
      %c0_11 = arith.constant 0 : index
      %c0_12 = arith.constant 0 : index
      %13 = vector.load %arg8[%c0_11, %c0_12] : memref<8x128xf32, #tpu.memory_space<vmem>>, vector<8x128xf32>
      tpu.vector_store %arg8[%c0_11, %c0_12], %12 {strides = array<i32>} : memref<8x128xf32, #tpu.memory_space<vmem>>, vector<8x128xf32>,
    } else {
    }
    %c0 = arith.constant 0 : index
    %c0_1 = arith.constant 0 : index
    %3 = vector.load %arg2[%c0, %c0_1] : memref<8x128xbf16, #tpu.memory_space<vmem>>, vector<8x128xbf16>
    %c0_2 = arith.constant 0 : index
    %c0_3 = arith.constant 0 : index
    %4 = vector.load %arg8[%c0_2, %c0_3] : memref<8x128xf32, #tpu.memory_space<vmem>>, vector<8x128xf32>
    %c0_4 = arith.constant 0 : index
    %c0_5 = arith.constant 0 : index
    %5 = vector.load %arg3[%c0_4, %c0_5] : memref<128x128xbf16, #tpu.memory_space<vmem>>, vector<128x128xbf16>
    %cst = arith.constant dense<0.000000e+00> : vector<8x128xf32>
    %6 = tpu.matmul %3, %5, %cst {dimension_numbers = #tpu.dot_dimension_numbers<[1], [0], [0], [1], [0, 0, 1, 1], [], []>} : vector<8x128xbf16>, vector<128x128xbf16>, vector<8x128xf32> -> vector<8x128xf32>
    %7 = arith.addf %4, %6 : vector<8x128xf32>
    %c0_6 = arith.constant 0 : index
    %c0_7 = arith.constant 0 : index
    %8 = vector.load %arg8[%c0_6, %c0_7] : memref<8x128xf32, #tpu.memory_space<vmem>>, vector<8x128xf32>
    tpu.vector_store %arg8[%c0_6, %c0_7], %7 {strides = array<i32>} : memref<8x128xf32, #tpu.memory_space<vmem>>, vector<8x128xf32>,
    %c0_i32_8 = arith.constant 0 : i32
    %9 = arith.cmpi eq, %arg1, %c0_i32_8 : i32
    %10 = arith.extui %9 : i1 to i32
    %c0_i32_9 = arith.constant 0 : i32
    %11 = arith.cmpi ne, %10, %c0_i32_9 : i32
    scf.if %11 {
      %c0_10 = arith.constant 0 : index
      %c0_11 = arith.constant 0 : index
      %12 = vector.load %arg8[%c0_10, %c0_11] : memref<8x128xf32, #tpu.memory_space<vmem>>, vector<8x128xf32>
      %c0_12 = arith.constant 0 : index
      %c0_13 = arith.constant 0 : index
      %13 = vector.load %arg4[%c0_12, %c0_13] : memref<1x128xf32, #tpu.memory_space<vmem>>, vector<1x128xf32>
      %14 = vector.broadcast %13 : vector<1x128xf32> to vector<8x128xf32>
      %15 = arith.addf %12, %14 : vector<8x128xf32>
      %cst_14 = arith.constant 0.000000e+00 : f32
      %16 = vector.broadcast %cst_14 : f32 to vector<8x128xf32>
      %17 = arith.maximumf %15, %16 : vector<8x128xf32>
      %18 = arith.truncf %17 : vector<8x128xf32> to vector<8x128xbf16>
      %c0_15 = arith.constant 0 : index
      %c0_16 = arith.constant 0 : index
      %19 = vector.load %arg5[%c0_15, %c0_16] : memref<128x128xbf16, #tpu.memory_space<vmem>>, vector<128x128xbf16>
      %cst_17 = arith.constant dense<0.000000e+00> : vector<8x128xf32>
      %20 = tpu.matmul %18, %19, %cst_17 {dimension_numbers = #tpu.dot_dimension_numbers<[1], [0], [0], [1], [0, 0, 1, 1], [], []>} : vector<8x128xbf16>, vector<128x128xbf16>, vector<8x128xf32> -> vector<8x128xf32>
      %c0_18 = arith.constant 0 : index
      %c0_19 = arith.constant 0 : index
      %21 = vector.load %arg6[%c0_18, %c0_19] : memref<1x128xf32, #tpu.memory_space<vmem>>, vector<1x128xf32>
      %22 = vector.broadcast %21 : vector<1x128xf32> to vector<8x128xf32>
      %23 = arith.addf %20, %22 : vector<8x128xf32>
      %c0_20 = arith.constant 0 : index
      %c0_21 = arith.constant 0 : index
      %24 = vector.load %arg7[%c0_20, %c0_21] : memref<8x128xf32, #tpu.memory_space<vmem>>, vector<8x128xf32>
      tpu.vector_store %arg7[%c0_20, %c0_21], %23 {strides = array<i32>} : memref<8x128xf32, #tpu.memory_space<vmem>>, vector<8x128xf32>,
    } else {
    }
    return
  }
  func.func @transform_0(%arg0: i32, %arg1: i32) -> (i32, i32) {
    %c0_i32 = arith.constant 0 : i32
    return %arg0, %arg1 : i32, i32
  }
  func.func @transform_1(%arg0: i32, %arg1: i32) -> (i32, i32) {
    %c0_i32 = arith.constant 0 : i32
    %c0_i32_0 = arith.constant 0 : i32
    return %arg1, %c0_i32 : i32, i32
  }
  func.func @transform_2(%arg0: i32, %arg1: i32) -> (i32, i32) {
    %c0_i32 = arith.constant 0 : i32
    %c0_i32_0 = arith.constant 0 : i32
    %c0_i32_1 = arith.constant 0 : i32
    return %c0_i32, %c0_i32_0 : i32, i32
  }
  func.func @transform_3(%arg0: i32, %arg1: i32) -> (i32, i32) {
    %c0_i32 = arith.constant 0 : i32
    %c0_i32_0 = arith.constant 0 : i32
    %c0_i32_1 = arith.constant 0 : i32
    return %c0_i32, %c0_i32_0 : i32, i32
  }
  func.func @transform_4(%arg0: i32, %arg1: i32) -> (i32, i32) {
    %c0_i32 = arith.constant 0 : i32
    %c0_i32_0 = arith.constant 0 : i32
    %c0_i32_1 = arith.constant 0 : i32
    return %c0_i32, %c0_i32_0 : i32, i32
  }
  func.func @transform_5(%arg0: i32, %arg1: i32) -> (i32, i32) {
    %c0_i32 = arith.constant 0 : i32
    %c0_i32_0 = arith.constant 0 : i32
    return %arg0, %c0_i32 : i32, i32
  }
}

module attributes {stable_mosaic.version = 11 : i64} {
  func.func @mlp_kernel(%arg0: i32, %arg1: i32, %arg2: memref<8x128xbf16, #tpu.memory_space<vmem>>, %arg3: memref<128x128xbf16, #tpu.memory_space<vmem>>, %arg4: memref<1x128xf32, #tpu.memory_space<vmem>>, %arg5: memref<128x128xbf16, #tpu.memory_space<vmem>>, %arg6: memref<1x128xf32, #tpu.memory_space<vmem>>, %arg7: memref<8x128xf32, #tpu.memory_space<vmem>>, %arg8: memref<8x128xf32, #tpu.memory_space<vmem>>) attributes {dimension_semantics = [#tpu.dimension_semantics<parallel>, #tpu.dimension_semantics<arbitrary>], iteration_bounds = array<i64: 1, 1>, scalar_prefetch = 0 : i64, scratch_operands = 1 : i64, tpu.core_type = #tpu.core_type<tc>, window_params = [{transform_indices = @transform_0, window_bounds = array<i64: 8, 128>}, {transform_indices = @transform_1, window_bounds = array<i64: 128, 128>}, {pipeline_mode = #tpu.pipeline_mode<synchronous>, transform_indices = @transform_2, window_bounds = array<i64: 1, 128>}, {pipeline_mode = #tpu.pipeline_mode<synchronous>, transform_indices = @transform_3, window_bounds = array<i64: 128, 128>}, {pipeline_mode = #tpu.pipeline_mode<synchronous>, transform_indices = @transform_4, window_bounds = array<i64: 1, 128>}, {transform_indices = @transform_5, window_bounds = array<i64: 8, 128>}]} {
    %c0_i32 = arith.constant 0 : i32
    %0 = arith.cmpi eq, %arg1, %c0_i32 : i32
    %1 = arith.extui %0 : i1 to i32
    %c0_i32_0 = arith.constant 0 : i32
    %2 = arith.cmpi ne, %1, %c0_i32_0 : i32
    scf.if %2 {
      %cst_10 = arith.constant 0.000000e+00 : f32
      %12 = vector.broadcast %cst_10 : f32 to vector<8x128xf32>
      %c0_11 = arith.constant 0 : index
      %c0_12 = arith.constant 0 : index
      %13 = vector.load %arg8[%c0_11, %c0_12] : memref<8x128xf32, #tpu.memory_space<vmem>>, vector<8x128xf32>
      tpu.vector_store %arg8[%c0_11, %c0_12], %12 {strides = array<i32>} : memref<8x128xf32, #tpu.memory_space<vmem>>, vector<8x128xf32>,
    } else {
    }
    %c0 = arith.constant 0 : index
    %c0_1 = arith.constant 0 : index
    %3 = vector.load %arg2[%c0, %c0_1] : memref<8x128xbf16, #tpu.memory_space<vmem>>, vector<8x128xbf16>
    %c0_2 = arith.constant 0 : index
    %c0_3 = arith.constant 0 : index
    %4 = vector.load %arg8[%c0_2, %c0_3] : memref<8x128xf32, #tpu.memory_space<vmem>>, vector<8x128xf32>
    %c0_4 = arith.constant 0 : index
    %c0_5 = arith.constant 0 : index
    %5 = vector.load %arg3[%c0_4, %c0_5] : memref<128x128xbf16, #tpu.memory_space<vmem>>, vector<128x128xbf16>
    %cst = arith.constant dense<0.000000e+00> : vector<8x128xf32>
    %6 = tpu.matmul %3, %5, %cst {dimension_numbers = #tpu.dot_dimension_numbers<[1], [0], [0], [1], [0, 0, 1, 1], [], []>} : vector<8x128xbf16>, vector<128x128xbf16>, vector<8x128xf32> -> vector<8x128xf32>
    %7 = arith.addf %4, %6 : vector<8x128xf32>
    %c0_6 = arith.constant 0 : index
    %c0_7 = arith.constant 0 : index
    %8 = vector.load %arg8[%c0_6, %c0_7] : memref<8x128xf32, #tpu.memory_space<vmem>>, vector<8x128xf32>
    tpu.vector_store %arg8[%c0_6, %c0_7], %7 {strides = array<i32>} : memref<8x128xf32, #tpu.memory_space<vmem>>, vector<8x128xf32>,
    %c0_i32_8 = arith.constant 0 : i32
    %9 = arith.cmpi eq, %arg1, %c0_i32_8 : i32
    %10 = arith.extui %9 : i1 to i32
    %c0_i32_9 = arith.constant 0 : i32
    %11 = arith.cmpi ne, %10, %c0_i32_9 : i32
    scf.if %11 {
      %c0_10 = arith.constant 0 : index
      %c0_11 = arith.constant 0 : index
      %12 = vector.load %arg8[%c0_10, %c0_11] : memref<8x128xf32, #tpu.memory_space<vmem>>, vector<8x128xf32>
      %c0_12 = arith.constant 0 : index
      %c0_13 = arith.constant 0 : index
      %13 = vector.load %arg4[%c0_12, %c0_13] : memref<1x128xf32, #tpu.memory_space<vmem>>, vector<1x128xf32>
      %14 = vector.broadcast %13 : vector<1x128xf32> to vector<8x128xf32>
      %15 = arith.addf %12, %14 : vector<8x128xf32>
      %cst_14 = arith.constant 0.000000e+00 : f32
      %16 = vector.broadcast %cst_14 : f32 to vector<8x128xf32>
      %17 = arith.maximumf %15, %16 : vector<8x128xf32>
      %18 = arith.truncf %17 : vector<8x128xf32> to vector<8x128xbf16>
      %c0_15 = arith.constant 0 : index
      %c0_16 = arith.constant 0 : index
      %19 = vector.load %arg5[%c0_15, %c0_16] : memref<128x128xbf16, #tpu.memory_space<vmem>>, vector<128x128xbf16>
      %cst_17 = arith.constant dense<0.000000e+00> : vector<8x128xf32>
      %20 = tpu.matmul %18, %19, %cst_17 {dimension_numbers = #tpu.dot_dimension_numbers<[1], [0], [0], [1], [0, 0, 1, 1], [], []>} : vector<8x128xbf16>, vector<128x128xbf16>, vector<8x128xf32> -> vector<8x128xf32>
      %c0_18 = arith.constant 0 : index
      %c0_19 = arith.constant 0 : index
      %21 = vector.load %arg6[%c0_18, %c0_19] : memref<1x128xf32, #tpu.memory_space<vmem>>, vector<1x128xf32>
      %22 = vector.broadcast %21 : vector<1x128xf32> to vector<8x128xf32>
      %23 = arith.addf %20, %22 : vector<8x128xf32>
      %c0_20 = arith.constant 0 : index
      %c0_21 = arith.constant 0 : index
      %24 = vector.load %arg7[%c0_20, %c0_21] : memref<8x128xf32, #tpu.memory_space<vmem>>, vector<8x128xf32>
      tpu.vector_store %arg7[%c0_20, %c0_21], %23 {strides = array<i32>} : memref<8x128xf32, #tpu.memory_space<vmem>>, vector<8x128xf32>,
    } else {
    }
    return
  }
  func.func @transform_0(%arg0: i32, %arg1: i32) -> (i32, i32) {
    %c0_i32 = arith.constant 0 : i32
    return %arg0, %arg1 : i32, i32
  }
  func.func @transform_1(%arg0: i32, %arg1: i32) -> (i32, i32) {
    %c0_i32 = arith.constant 0 : i32
    %c0_i32_0 = arith.constant 0 : i32
    return %arg1, %c0_i32 : i32, i32
  }
  func.func @transform_2(%arg0: i32, %arg1: i32) -> (i32, i32) {
    %c0_i32 = arith.constant 0 : i32
    %c0_i32_0 = arith.constant 0 : i32
    %c0_i32_1 = arith.constant 0 : i32
    return %c0_i32, %c0_i32_0 : i32, i32
  }
  func.func @transform_3(%arg0: i32, %arg1: i32) -> (i32, i32) {
    %c0_i32 = arith.constant 0 : i32
    %c0_i32_0 = arith.constant 0 : i32
    %c0_i32_1 = arith.constant 0 : i32
    return %c0_i32, %c0_i32_0 : i32, i32
  }
  func.func @transform_4(%arg0: i32, %arg1: i32) -> (i32, i32) {
    %c0_i32 = arith.constant 0 : i32
    %c0_i32_0 = arith.constant 0 : i32
    %c0_i32_1 = arith.constant 0 : i32
    return %c0_i32, %c0_i32_0 : i32, i32
  }
  func.func @transform_5(%arg0: i32, %arg1: i32) -> (i32, i32) {
    %c0_i32 = arith.constant 0 : i32
    %c0_i32_0 = arith.constant 0 : i32
    return %arg0, %c0_i32 : i32, i32
  }
}

</mosaic_0001>

<llo_original>
// kernel: tpu_custom_call.1
$region0: #{tpu_custom_call.1}
  #allocation0 [shape = 'u32[]', space=smem, size = 0x4, offset = 0x4, fixed_abs, tag = 'smem constant byte address 0x4 - core index']
  #allocation1 [shape = 'u32[72,128]{1,0:T(1,128)}', space=vmem, size = 0x9000, scoped, tag = 'internal scratch']
  #allocation2 [shape = 'f32[8,128]{1,0:T(8,128)}', space=vmem, size = 0x1000, scoped, tag = 'scratch operand']
  %s0 = inlined_call_operand.hbm [shape: bf16[8,128], index: 0, kind: input, shape index: {}]
  %s1 = inlined_call_operand.hbm [shape: bf16[128,128], index: 1, kind: input, shape index: {}]
  %s2 = inlined_call_operand.vmem [shape: f32[1,128], index: 2, kind: input, shape index: {}]
  %s3 = inlined_call_operand.hbm [shape: bf16[128,128], index: 3, kind: input, shape index: {}]
  %s4 = inlined_call_operand.vmem [shape: f32[1,128], index: 4, kind: input, shape index: {}]
  %s5 = inlined_call_operand.hbm [shape: f32[8,128], index: 5, kind: output, shape index: {}]
  %s6 = sld [smem:[#allocation0]]
  $region50: #{tpu_custom_call.1} parent=0
    _
  %s8 = ssub.s32 1, %s6
  %s9 = scalar_select 0, %s8, %s6
  $region1: #{tpu_custom_call.1} parent=0
    #allocation3 [shape = 'u8[2048]{0}', space=vmem, size = 0x800, scoped, tag = 'input window, operand 0, single buffered']
    #allocation4 [shape = 's32[1]{0}', space=sflag, size = 0x4, scoped, tag = 'scoped memory for tpu_custom_call.1']
    #allocation5 [shape = 's32[1]{0}', space=sflag, size = 0x4, scoped, tag = 'scoped memory for tpu_custom_call.1']
    #allocation6 [shape = 'u8[32768]{0}', space=vmem, size = 0x8000, scoped, tag = 'input window, operand 1, single buffered']
    #allocation7 [shape = 's32[1]{0}', space=sflag, size = 0x4, scoped, tag = 'scoped memory for tpu_custom_call.1']
    #allocation8 [shape = 'u8[32768]{0}', space=vmem, size = 0x8000, scoped, tag = 'input window, operand 3, single buffered']
    #allocation9 [shape = 'u8[4096]{0}', space=vmem, size = 0x1000, scoped, tag = 'output window, operand 0, single buffered']
    %10 = vsyncpa [#allocation4], 0
    %11 = vsyncpa [#allocation7], 0
    %12 = vsyncpa [#allocation5], 0
    // Predicated region
    $region2: #{tpu_custom_call.1} parent=1 // pred_check
      _
    $region3: #{tpu_custom_call.1} parent=1 // pred_check_branch
      %14 = sbr.rel (0) target = $region5
    $region4: #{tpu_custom_call.1} parent=1 // pred_region
      %16 = vsyncadd [#allocation4], 0
      %s18 = sshll.u32 %s0, 4
      %s19 = int_to_ptr.hbm [resolvable:$true] %s18
      %s20 = sshll.u32 [#allocation3], 4
      %s21 = int_to_ptr.vmem [resolvable:$true] %s20
      %23 = dma.hbm_to_vmem [thread:$0]  %s19, 64, %s21, [#allocation4]
    $region5: #{tpu_custom_call.1} parent=1 // pred_fallthru
      _
    // Predicated region
    $region6: #{tpu_custom_call.1} parent=1 // pred_check
      _
    $region7: #{tpu_custom_call.1} parent=1 // pred_check_branch
      %25 = sbr.rel (0) target = $region9
    $region8: #{tpu_custom_call.1} parent=1 // pred_region
      %27 = vsyncadd [#allocation7], 0
      %s28 = sshll.u32 %s1, 4
      %s29 = int_to_ptr.hbm [resolvable:$true] %s28
      %s30 = sshll.u32 [#allocation6], 4
      %s31 = int_to_ptr.vmem [resolvable:$true] %s30
      %36 = dma.hbm_to_vmem [thread:$0]  %s29, 1024, %s31, [#allocation7], 64, 64, 4
    $region9: #{tpu_custom_call.1} parent=1 // pred_fallthru
      _
    // Predicated region
    $region10: #{tpu_custom_call.1} parent=1 // pred_check
      _
    $region11: #{tpu_custom_call.1} parent=1 // pred_check_branch
      %38 = sbr.rel (0) target = $region13
    $region12: #{tpu_custom_call.1} parent=1 // pred_region
      _
    $region13: #{tpu_custom_call.1} parent=1 // pred_fallthru
      _
    // Predicated region
    $region14: #{tpu_custom_call.1} parent=1 // pred_check
      _
    $region15: #{tpu_custom_call.1} parent=1 // pred_check_branch
      %40 = sbr.rel (0) target = $region17
    $region16: #{tpu_custom_call.1} parent=1 // pred_region
      %42 = vsyncadd [#allocation7], 0
      %s43 = sshll.u32 %s3, 4
      %s44 = int_to_ptr.hbm [resolvable:$true] %s43
      %s45 = sshll.u32 [#allocation8], 4
      %s46 = int_to_ptr.vmem [resolvable:$true] %s45
      %51 = dma.hbm_to_vmem [thread:$0]  %s44, 1024, %s46, [#allocation7], 64, 64, 4
    $region17: #{tpu_custom_call.1} parent=1 // pred_fallthru
      _
    // Predicated region
    $region18: #{tpu_custom_call.1} parent=1 // pred_check
      _
    $region19: #{tpu_custom_call.1} parent=1 // pred_check_branch
      %53 = sbr.rel (0) target = $region21
    $region20: #{tpu_custom_call.1} parent=1 // pred_region
      _
    $region21: #{tpu_custom_call.1} parent=1 // pred_fallthru
      _
    // Predicated region
    $region22: #{tpu_custom_call.1} parent=1 // pred_check
      _
    $region23: #{tpu_custom_call.1} parent=1 // pred_check_branch
      %55 = sbr.rel (0) target = $region25
    $region24: #{tpu_custom_call.1} parent=1 // pred_region
      %57 = dma.done [#allocation4], 64
    $region25: #{tpu_custom_call.1} parent=1 // pred_fallthru
      _
    // Predicated region
    $region26: #{tpu_custom_call.1} parent=1 // pred_check
      _
    $region27: #{tpu_custom_call.1} parent=1 // pred_check_branch
      %59 = sbr.rel (0) target = $region29
    $region28: #{tpu_custom_call.1} parent=1 // pred_region
      %61 = dma.done [#allocation7], 1024
    $region29: #{tpu_custom_call.1} parent=1 // pred_fallthru
      _
    // Predicated region
    $region30: #{tpu_custom_call.1} parent=1 // pred_check
      _
    $region31: #{tpu_custom_call.1} parent=1 // pred_check_branch
      %63 = sbr.rel (0) target = $region33
    $region32: #{tpu_custom_call.1} parent=1 // pred_region
      %65 = dma.done [#allocation7], 1024
    $region33: #{tpu_custom_call.1} parent=1 // pred_fallthru
      _
    %p66 = scmp.eq.s32.totalorder 0, 0
    // Predicated region
    $region34: #{tpu_custom_call.1} parent=1 // pred_check
      %p67 = pneg %p66
    $region35: #{tpu_custom_call.1} parent=1 // pred_check_branch
      %69 = sbr.rel (%p67) target = $region37
    $region36: #{tpu_custom_call.1} parent=1 // pred_region
      %70 = vst [vmem:[#allocation2] sm:$0xff] 0.0
    $region37: #{tpu_custom_call.1} parent=1 // pred_fallthru
      _
    %v71 = vld [vmem:[#allocation3] sm:$0xf]
    %v72 = vld [vmem:[#allocation2] sm:$0xff]
    %v73 = vld [vmem:[#allocation6] sm:$0xf]
    %v74 = vld [vmem:[#allocation6 + $0x4] sm:$0xf]
    %v75 = vld [vmem:[#allocation6 + $0x8] sm:$0xf]
    %v76 = vld [vmem:[#allocation6 + $0xc] sm:$0xf]
    %v77 = vld [vmem:[#allocation6 + $0x10] sm:$0xf]
    %v78 = vld [vmem:[#allocation6 + $0x14] sm:$0xf]
    %v79 = vld [vmem:[#allocation6 + $0x18] sm:$0xf]
    %v80 = vld [vmem:[#allocation6 + $0x1c] sm:$0xf]
    %v81 = vld [vmem:[#allocation6 + $0x20] sm:$0xf]
    %v82 = vld [vmem:[#allocation6 + $0x24] sm:$0xf]
    %v83 = vld [vmem:[#allocation6 + $0x28] sm:$0xf]
    %v84 = vld [vmem:[#allocation6 + $0x2c] sm:$0xf]
    %v85 = vld [vmem:[#allocation6 + $0x30] sm:$0xf]
    %v86 = vld [vmem:[#allocation6 + $0x34] sm:$0xf]
    %v87 = vld [vmem:[#allocation6 + $0x38] sm:$0xf]
    %v88 = vld [vmem:[#allocation6 + $0x3c] sm:$0xf]
    %v105 = vunpack.c.l.b16 %v73
    %v106 = vunpack.c.l.b16 %v74
    %v107 = vunpack.c.l.b16 %v75
    %v108 = vunpack.c.l.b16 %v76
    %v109 = vunpack.c.l.b16 %v77
    %v110 = vunpack.c.l.b16 %v78
    %v111 = vunpack.c.l.b16 %v79
    %v112 = vunpack.c.l.b16 %v80
    %v113 = vunpack.c.l.b16 %v81
    %v114 = vunpack.c.l.b16 %v82
    %v115 = vunpack.c.l.b16 %v83
    %v116 = vunpack.c.l.b16 %v84
    %v117 = vunpack.c.l.b16 %v85
    %v118 = vunpack.c.l.b16 %v86
    %v119 = vunpack.c.l.b16 %v87
    %v120 = vunpack.c.l.b16 %v88
    %v121 = vpack.c.b16 %v106, %v105
    %v122 = vpack.c.b16 %v108, %v107
    %v123 = vpack.c.b16 %v110, %v109
    %v124 = vpack.c.b16 %v112, %v111
    %v125 = vpack.c.b16 %v114, %v113
    %v126 = vpack.c.b16 %v116, %v115
    %v127 = vpack.c.b16 %v118, %v117
    %v128 = vpack.c.b16 %v120, %v119
    %137 = vmatpush.bf16.msra.mxu0 %v128
    %138 = vmatpush.bf16.msra.mxu0 %v127
    %139 = vmatpush.bf16.msra.mxu0 %v126
    %140 = vmatpush.bf16.msra.mxu0 %v125
    %141 = vmatpush.bf16.msra.mxu0 %v124
    %142 = vmatpush.bf16.msra.mxu0 %v123
    %143 = vmatpush.bf16.msra.mxu0 %v122
    %144 = vmatpush.bf16.msra.mxu0 %v121
    %145 = vmatmul.bf16.gmra.mxu0 %v71
    %v146 = vpop.f32.mrf.mxu0
    %v147 = vadd.f32 0.0, %v146
    %v148 = vpop.f32.mrf.mxu0
    %149 = vdwg.mxu0
    %v150 = vadd.f32 %v72, %v147
    %151 = vst [vmem:[#allocation2] sm:$0xff] %v150
    // Predicated region
    $region38: #{tpu_custom_call.1} parent=1 // pred_check
      %p152 = pneg %p66
    $region39: #{tpu_custom_call.1} parent=1 // pred_check_branch
      %154 = sbr.rel (%p152) target = $region41
    $region40: #{tpu_custom_call.1} parent=1 // pred_region
      %v155 = vld [vmem:[#allocation2] sm:$0xff]
      %v156 = vld [vmem:[%s2] sm:$0x1]
      %v158 = vperm.slane %v156, 0
      %v160 = vadd.f32 %v155, %v158
      %v161 = vmax.f32 %v160, 0.0
      %v162 = vpack.c.bf16 %v161, %v161
      %v163 = vld [vmem:[#allocation8] sm:$0xf]
      %v164 = vld [vmem:[#allocation8 + $0x4] sm:$0xf]
      %v165 = vld [vmem:[#allocation8 + $0x8] sm:$0xf]
      %v166 = vld [vmem:[#allocation8 + $0xc] sm:$0xf]
      %v167 = vld [vmem:[#allocation8 + $0x10] sm:$0xf]
      %v168 = vld [vmem:[#allocation8 + $0x14] sm:$0xf]
      %v169 = vld [vmem:[#allocation8 + $0x18] sm:$0xf]
      %v170 = vld [vmem:[#allocation8 + $0x1c] sm:$0xf]
      %v171 = vld [vmem:[#allocation8 + $0x20] sm:$0xf]
      %v172 = vld [vmem:[#allocation8 + $0x24] sm:$0xf]
      %v173 = vld [vmem:[#allocation8 + $0x28] sm:$0xf]
      %v174 = vld [vmem:[#allocation8 + $0x2c] sm:$0xf]
      %v175 = vld [vmem:[#allocation8 + $0x30] sm:$0xf]
      %v176 = vld [vmem:[#allocation8 + $0x34] sm:$0xf]
      %v177 = vld [vmem:[#allocation8 + $0x38] sm:$0xf]
      %v178 = vld [vmem:[#allocation8 + $0x3c] sm:$0xf]
      %v179 = vld [vmem:[%s4] sm:$0x1]
      %v181 = vperm.slane %v179, 0
      %v199 = vunpack.c.l.b16 %v163
      %v200 = vunpack.c.l.b16 %v164
      %v201 = vunpack.c.l.b16 %v165
      %v202 = vunpack.c.l.b16 %v166
      %v203 = vunpack.c.l.b16 %v167
      %v204 = vunpack.c.l.b16 %v168
      %v205 = vunpack.c.l.b16 %v169
      %v206 = vunpack.c.l.b16 %v170
      %v207 = vunpack.c.l.b16 %v171
      %v208 = vunpack.c.l.b16 %v172
      %v209 = vunpack.c.l.b16 %v173
      %v210 = vunpack.c.l.b16 %v174
      %v211 = vunpack.c.l.b16 %v175
      %v212 = vunpack.c.l.b16 %v176
      %v213 = vunpack.c.l.b16 %v177
      %v214 = vunpack.c.l.b16 %v178
      %v215 = vpack.c.b16 %v200, %v199
      %v216 = vpack.c.b16 %v202, %v201
      %v217 = vpack.c.b16 %v204, %v203
      %v218 = vpack.c.b16 %v206, %v205
      %v219 = vpack.c.b16 %v208, %v207
      %v220 = vpack.c.b16 %v210, %v209
      %v221 = vpack.c.b16 %v212, %v211
      %v222 = vpack.c.b16 %v214, %v213
      %231 = vmatpush.bf16.msra.mxu0 %v222
      %232 = vmatpush.bf16.msra.mxu0 %v221
      %233 = vmatpush.bf16.msra.mxu0 %v220
      %234 = vmatpush.bf16.msra.mxu0 %v219
      %235 = vmatpush.bf16.msra.mxu0 %v218
      %236 = vmatpush.bf16.msra.mxu0 %v217
      %237 = vmatpush.bf16.msra.mxu0 %v216
      %238 = vmatpush.bf16.msra.mxu0 %v215
      %239 = vmatmul.bf16.gmra.mxu0 %v162
      %v240 = vpop.f32.mrf.mxu0
      %v241 = vadd.f32 %v181, %v240
      %v242 = vpop.f32.mrf.mxu0
      %243 = vdwg.mxu0
      %244 = vst [vmem:[#allocation9] sm:$0xff] %v241
    $region41: #{tpu_custom_call.1} parent=1 // pred_fallthru
      _
    // Predicated region
    $region42: #{tpu_custom_call.1} parent=1 // pred_check
      _
    $region43: #{tpu_custom_call.1} parent=1 // pred_check_branch
      %246 = sbr.rel (0) target = $region45
    $region44: #{tpu_custom_call.1} parent=1 // pred_region
      %248 = vsyncadd [#allocation5], 0
      %s250 = sshll.u32 [#allocation9], 4
      %s251 = int_to_ptr.vmem [resolvable:$true] %s250
      %s252 = sshll.u32 %s5, 4
      %s253 = int_to_ptr.hbm [resolvable:$true] %s252
      %255 = dma.vmem_to_hbm [thread:$0]  %s251, 128, %s253, [#allocation5]
    $region45: #{tpu_custom_call.1} parent=1 // pred_fallthru
      _
    // Predicated region
    $region46: #{tpu_custom_call.1} parent=1 // pred_check
      _
    $region47: #{tpu_custom_call.1} parent=1 // pred_check_branch
      %257 = sbr.rel (0) target = $region49
    $region48: #{tpu_custom_call.1} parent=1 // pred_region
      %259 = dma.done [#allocation5], 128
    $region49: #{tpu_custom_call.1} parent=1 // pred_fallthru
      _
    %260 = vsyncpa [#allocation4], 1
    %261 = vsyncpa [#allocation7], 1
    %262 = vsyncpa [#allocation5], 1

// kernel: tpu_custom_call.1
$region0: #{tpu_custom_call.1}
  #allocation0 [shape = 'u32[]', space=smem, size = 0x4, offset = 0x4, fixed_abs, tag = 'smem constant byte address 0x4 - core index']
  #allocation1 [shape = 'u32[72,128]{1,0:T(1,128)}', space=vmem, size = 0x9000, scoped, tag = 'internal scratch']
  #allocation2 [shape = 'f32[8,128]{1,0:T(8,128)}', space=vmem, size = 0x1000, scoped, tag = 'scratch operand']
  %s0 = inlined_call_operand.hbm [shape: bf16[8,128], index: 0, kind: input, shape index: {}]
  %s1 = inlined_call_operand.hbm [shape: bf16[128,128], index: 1, kind: input, shape index: {}]
  %s2 = inlined_call_operand.vmem [shape: f32[1,128], index: 2, kind: input, shape index: {}]
  %s3 = inlined_call_operand.hbm [shape: bf16[128,128], index: 3, kind: input, shape index: {}]
  %s4 = inlined_call_operand.vmem [shape: f32[1,128], index: 4, kind: input, shape index: {}]
  %s5 = inlined_call_operand.hbm [shape: f32[8,128], index: 5, kind: output, shape index: {}]
  %s6 = sld [smem:[#allocation0]]
  $region50: #{tpu_custom_call.1} parent=0
    _
  %s8 = ssub.s32 1, %s6
  %s9 = scalar_select 0, %s8, %s6
  $region1: #{tpu_custom_call.1} parent=0
    #allocation3 [shape = 'u8[2048]{0}', space=vmem, size = 0x800, scoped, tag = 'input window, operand 0, single buffered']
    #allocation4 [shape = 's32[1]{0}', space=sflag, size = 0x4, scoped, tag = 'scoped memory for tpu_custom_call.1']
    #allocation5 [shape = 's32[1]{0}', space=sflag, size = 0x4, scoped, tag = 'scoped memory for tpu_custom_call.1']
    #allocation6 [shape = 'u8[32768]{0}', space=vmem, size = 0x8000, scoped, tag = 'input window, operand 1, single buffered']
    #allocation7 [shape = 's32[1]{0}', space=sflag, size = 0x4, scoped, tag = 'scoped memory for tpu_custom_call.1']
    #allocation8 [shape = 'u8[32768]{0}', space=vmem, size = 0x8000, scoped, tag = 'input window, operand 3, single buffered']
    #allocation9 [shape = 'u8[4096]{0}', space=vmem, size = 0x1000, scoped, tag = 'output window, operand 0, single buffered']
    %10 = vsyncpa [#allocation4], 0
    %11 = vsyncpa [#allocation7], 0
    %12 = vsyncpa [#allocation5], 0
    // Predicated region
    $region2: #{tpu_custom_call.1} parent=1 // pred_check
      _
    $region3: #{tpu_custom_call.1} parent=1 // pred_check_branch
      %14 = sbr.rel (0) target = $region5
    $region4: #{tpu_custom_call.1} parent=1 // pred_region
      %16 = vsyncadd [#allocation4], 0
      %s18 = sshll.u32 %s0, 4
      %s19 = int_to_ptr.hbm [resolvable:$true] %s18
      %s20 = sshll.u32 [#allocation3], 4
      %s21 = int_to_ptr.vmem [resolvable:$true] %s20
      %23 = dma.hbm_to_vmem [thread:$0]  %s19, 64, %s21, [#allocation4]
    $region5: #{tpu_custom_call.1} parent=1 // pred_fallthru
      _
    // Predicated region
    $region6: #{tpu_custom_call.1} parent=1 // pred_check
      _
    $region7: #{tpu_custom_call.1} parent=1 // pred_check_branch
      %25 = sbr.rel (0) target = $region9
    $region8: #{tpu_custom_call.1} parent=1 // pred_region
      %27 = vsyncadd [#allocation7], 0
      %s28 = sshll.u32 %s1, 4
      %s29 = int_to_ptr.hbm [resolvable:$true] %s28
      %s30 = sshll.u32 [#allocation6], 4
      %s31 = int_to_ptr.vmem [resolvable:$true] %s30
      %36 = dma.hbm_to_vmem [thread:$0]  %s29, 1024, %s31, [#allocation7], 64, 64, 4
    $region9: #{tpu_custom_call.1} parent=1 // pred_fallthru
      _
    // Predicated region
    $region10: #{tpu_custom_call.1} parent=1 // pred_check
      _
    $region11: #{tpu_custom_call.1} parent=1 // pred_check_branch
      %38 = sbr.rel (0) target = $region13
    $region12: #{tpu_custom_call.1} parent=1 // pred_region
      _
    $region13: #{tpu_custom_call.1} parent=1 // pred_fallthru
      _
    // Predicated region
    $region14: #{tpu_custom_call.1} parent=1 // pred_check
      _
    $region15: #{tpu_custom_call.1} parent=1 // pred_check_branch
      %40 = sbr.rel (0) target = $region17
    $region16: #{tpu_custom_call.1} parent=1 // pred_region
      %42 = vsyncadd [#allocation7], 0
      %s43 = sshll.u32 %s3, 4
      %s44 = int_to_ptr.hbm [resolvable:$true] %s43
      %s45 = sshll.u32 [#allocation8], 4
      %s46 = int_to_ptr.vmem [resolvable:$true] %s45
      %51 = dma.hbm_to_vmem [thread:$0]  %s44, 1024, %s46, [#allocation7], 64, 64, 4
    $region17: #{tpu_custom_call.1} parent=1 // pred_fallthru
      _
    // Predicated region
    $region18: #{tpu_custom_call.1} parent=1 // pred_check
      _
    $region19: #{tpu_custom_call.1} parent=1 // pred_check_branch
      %53 = sbr.rel (0) target = $region21
    $region20: #{tpu_custom_call.1} parent=1 // pred_region
      _
    $region21: #{tpu_custom_call.1} parent=1 // pred_fallthru
      _
    // Predicated region
    $region22: #{tpu_custom_call.1} parent=1 // pred_check
      _
    $region23: #{tpu_custom_call.1} parent=1 // pred_check_branch
      %55 = sbr.rel (0) target = $region25
    $region24: #{tpu_custom_call.1} parent=1 // pred_region
      %57 = dma.done [#allocation4], 64
    $region25: #{tpu_custom_call.1} parent=1 // pred_fallthru
      _
    // Predicated region
    $region26: #{tpu_custom_call.1} parent=1 // pred_check
      _
    $region27: #{tpu_custom_call.1} parent=1 // pred_check_branch
      %59 = sbr.rel (0) target = $region29
    $region28: #{tpu_custom_call.1} parent=1 // pred_region
      %61 = dma.done [#allocation7], 1024
    $region29: #{tpu_custom_call.1} parent=1 // pred_fallthru
      _
    // Predicated region
    $region30: #{tpu_custom_call.1} parent=1 // pred_check
      _
    $region31: #{tpu_custom_call.1} parent=1 // pred_check_branch
      %63 = sbr.rel (0) target = $region33
    $region32: #{tpu_custom_call.1} parent=1 // pred_region
      %65 = dma.done [#allocation7], 1024
    $region33: #{tpu_custom_call.1} parent=1 // pred_fallthru
      _
    %p66 = scmp.eq.s32.totalorder 0, 0
    // Predicated region
    $region34: #{tpu_custom_call.1} parent=1 // pred_check
      %p67 = pneg %p66
    $region35: #{tpu_custom_call.1} parent=1 // pred_check_branch
      %69 = sbr.rel (%p67) target = $region37
    $region36: #{tpu_custom_call.1} parent=1 // pred_region
      %70 = vst [vmem:[#allocation2] sm:$0xff] 0.0
    $region37: #{tpu_custom_call.1} parent=1 // pred_fallthru
      _
    %v71 = vld [vmem:[#allocation3] sm:$0xf]
    %v72 = vld [vmem:[#allocation2] sm:$0xff]
    %v73 = vld [vmem:[#allocation6] sm:$0xf]
    %v74 = vld [vmem:[#allocation6 + $0x4] sm:$0xf]
    %v75 = vld [vmem:[#allocation6 + $0x8] sm:$0xf]
    %v76 = vld [vmem:[#allocation6 + $0xc] sm:$0xf]
    %v77 = vld [vmem:[#allocation6 + $0x10] sm:$0xf]
    %v78 = vld [vmem:[#allocation6 + $0x14] sm:$0xf]
    %v79 = vld [vmem:[#allocation6 + $0x18] sm:$0xf]
    %v80 = vld [vmem:[#allocation6 + $0x1c] sm:$0xf]
    %v81 = vld [vmem:[#allocation6 + $0x20] sm:$0xf]
    %v82 = vld [vmem:[#allocation6 + $0x24] sm:$0xf]
    %v83 = vld [vmem:[#allocation6 + $0x28] sm:$0xf]
    %v84 = vld [vmem:[#allocation6 + $0x2c] sm:$0xf]
    %v85 = vld [vmem:[#allocation6 + $0x30] sm:$0xf]
    %v86 = vld [vmem:[#allocation6 + $0x34] sm:$0xf]
    %v87 = vld [vmem:[#allocation6 + $0x38] sm:$0xf]
    %v88 = vld [vmem:[#allocation6 + $0x3c] sm:$0xf]
    %v105 = vunpack.c.l.b16 %v73
    %v106 = vunpack.c.l.b16 %v74
    %v107 = vunpack.c.l.b16 %v75
    %v108 = vunpack.c.l.b16 %v76
    %v109 = vunpack.c.l.b16 %v77
    %v110 = vunpack.c.l.b16 %v78
    %v111 = vunpack.c.l.b16 %v79
    %v112 = vunpack.c.l.b16 %v80
    %v113 = vunpack.c.l.b16 %v81
    %v114 = vunpack.c.l.b16 %v82
    %v115 = vunpack.c.l.b16 %v83
    %v116 = vunpack.c.l.b16 %v84
    %v117 = vunpack.c.l.b16 %v85
    %v118 = vunpack.c.l.b16 %v86
    %v119 = vunpack.c.l.b16 %v87
    %v120 = vunpack.c.l.b16 %v88
    %v121 = vpack.c.b16 %v106, %v105
    %v122 = vpack.c.b16 %v108, %v107
    %v123 = vpack.c.b16 %v110, %v109
    %v124 = vpack.c.b16 %v112, %v111
    %v125 = vpack.c.b16 %v114, %v113
    %v126 = vpack.c.b16 %v116, %v115
    %v127 = vpack.c.b16 %v118, %v117
    %v128 = vpack.c.b16 %v120, %v119
    %137 = vmatpush.bf16.msra.mxu0 %v128
    %138 = vmatpush.bf16.msra.mxu0 %v127
    %139 = vmatpush.bf16.msra.mxu0 %v126
    %140 = vmatpush.bf16.msra.mxu0 %v125
    %141 = vmatpush.bf16.msra.mxu0 %v124
    %142 = vmatpush.bf16.msra.mxu0 %v123
    %143 = vmatpush.bf16.msra.mxu0 %v122
    %144 = vmatpush.bf16.msra.mxu0 %v121
    %145 = vmatmul.bf16.gmra.mxu0 %v71
    %v146 = vpop.f32.mrf.mxu0
    %v147 = vadd.f32 0.0, %v146
    %v148 = vpop.f32.mrf.mxu0
    %149 = vdwg.mxu0
    %v150 = vadd.f32 %v72, %v147
    %151 = vst [vmem:[#allocation2] sm:$0xff] %v150
    // Predicated region
    $region38: #{tpu_custom_call.1} parent=1 // pred_check
      %p152 = pneg %p66
    $region39: #{tpu_custom_call.1} parent=1 // pred_check_branch
      %154 = sbr.rel (%p152) target = $region41
    $region40: #{tpu_custom_call.1} parent=1 // pred_region
      %v155 = vld [vmem:[#allocation2] sm:$0xff]
      %v156 = vld [vmem:[%s2] sm:$0x1]
      %v158 = vperm.slane %v156, 0
      %v160 = vadd.f32 %v155, %v158
      %v161 = vmax.f32 %v160, 0.0
      %v162 = vpack.c.bf16 %v161, %v161
      %v163 = vld [vmem:[#allocation8] sm:$0xf]
      %v164 = vld [vmem:[#allocation8 + $0x4] sm:$0xf]
      %v165 = vld [vmem:[#allocation8 + $0x8] sm:$0xf]
      %v166 = vld [vmem:[#allocation8 + $0xc] sm:$0xf]
      %v167 = vld [vmem:[#allocation8 + $0x10] sm:$0xf]
      %v168 = vld [vmem:[#allocation8 + $0x14] sm:$0xf]
      %v169 = vld [vmem:[#allocation8 + $0x18] sm:$0xf]
      %v170 = vld [vmem:[#allocation8 + $0x1c] sm:$0xf]
      %v171 = vld [vmem:[#allocation8 + $0x20] sm:$0xf]
      %v172 = vld [vmem:[#allocation8 + $0x24] sm:$0xf]
      %v173 = vld [vmem:[#allocation8 + $0x28] sm:$0xf]
      %v174 = vld [vmem:[#allocation8 + $0x2c] sm:$0xf]
      %v175 = vld [vmem:[#allocation8 + $0x30] sm:$0xf]
      %v176 = vld [vmem:[#allocation8 + $0x34] sm:$0xf]
      %v177 = vld [vmem:[#allocation8 + $0x38] sm:$0xf]
      %v178 = vld [vmem:[#allocation8 + $0x3c] sm:$0xf]
      %v179 = vld [vmem:[%s4] sm:$0x1]
      %v181 = vperm.slane %v179, 0
      %v199 = vunpack.c.l.b16 %v163
      %v200 = vunpack.c.l.b16 %v164
      %v201 = vunpack.c.l.b16 %v165
      %v202 = vunpack.c.l.b16 %v166
      %v203 = vunpack.c.l.b16 %v167
      %v204 = vunpack.c.l.b16 %v168
      %v205 = vunpack.c.l.b16 %v169
      %v206 = vunpack.c.l.b16 %v170
      %v207 = vunpack.c.l.b16 %v171
      %v208 = vunpack.c.l.b16 %v172
      %v209 = vunpack.c.l.b16 %v173
      %v210 = vunpack.c.l.b16 %v174
      %v211 = vunpack.c.l.b16 %v175
      %v212 = vunpack.c.l.b16 %v176
      %v213 = vunpack.c.l.b16 %v177
      %v214 = vunpack.c.l.b16 %v178
      %v215 = vpack.c.b16 %v200, %v199
      %v216 = vpack.c.b16 %v202, %v201
      %v217 = vpack.c.b16 %v204, %v203
      %v218 = vpack.c.b16 %v206, %v205
      %v219 = vpack.c.b16 %v208, %v207
      %v220 = vpack.c.b16 %v210, %v209
      %v221 = vpack.c.b16 %v212, %v211
      %v222 = vpack.c.b16 %v214, %v213
      %231 = vmatpush.bf16.msra.mxu0 %v222
      %232 = vmatpush.bf16.msra.mxu0 %v221
      %233 = vmatpush.bf16.msra.mxu0 %v220
      %234 = vmatpush.bf16.msra.mxu0 %v219
      %235 = vmatpush.bf16.msra.mxu0 %v218
      %236 = vmatpush.bf16.msra.mxu0 %v217
      %237 = vmatpush.bf16.msra.mxu0 %v216
      %238 = vmatpush.bf16.msra.mxu0 %v215
      %239 = vmatmul.bf16.gmra.mxu0 %v162
      %v240 = vpop.f32.mrf.mxu0
      %v241 = vadd.f32 %v181, %v240
      %v242 = vpop.f32.mrf.mxu0
      %243 = vdwg.mxu0
      %244 = vst [vmem:[#allocation9] sm:$0xff] %v241
    $region41: #{tpu_custom_call.1} parent=1 // pred_fallthru
      _
    // Predicated region
    $region42: #{tpu_custom_call.1} parent=1 // pred_check
      _
    $region43: #{tpu_custom_call.1} parent=1 // pred_check_branch
      %246 = sbr.rel (0) target = $region45
    $region44: #{tpu_custom_call.1} parent=1 // pred_region
      %248 = vsyncadd [#allocation5], 0
      %s250 = sshll.u32 [#allocation9], 4
      %s251 = int_to_ptr.vmem [resolvable:$true] %s250
      %s252 = sshll.u32 %s5, 4
      %s253 = int_to_ptr.hbm [resolvable:$true] %s252
      %255 = dma.vmem_to_hbm [thread:$0]  %s251, 128, %s253, [#allocation5]
    $region45: #{tpu_custom_call.1} parent=1 // pred_fallthru
      _
    // Predicated region
    $region46: #{tpu_custom_call.1} parent=1 // pred_check
      _
    $region47: #{tpu_custom_call.1} parent=1 // pred_check_branch
      %257 = sbr.rel (0) target = $region49
    $region48: #{tpu_custom_call.1} parent=1 // pred_region
      %259 = dma.done [#allocation5], 128
    $region49: #{tpu_custom_call.1} parent=1 // pred_fallthru
      _
    %260 = vsyncpa [#allocation4], 1
    %261 = vsyncpa [#allocation7], 1
    %262 = vsyncpa [#allocation5], 1

</llo_original>
